<compile_context>
chip_gen: v7x
topology: tpu7x:2x2x1
jax: 0.10.0
libtpu: 0.0.40
codegen_flags: <defaults>
</compile_context>

<pallas_src>
import functools

import jax
import jax.numpy as jnp
from jax import lax
from jax.experimental import pallas as pl
from jax.experimental.pallas import tpu as pltpu


_VMEM_LIMIT = 32 * 1024 * 1024  # explicit scoped-VMEM cap, safe on v5e/v6e/v7x


# ----------------------------- tiling helpers --------------------------------


def _round_up(x, m):
    return ((x + m - 1) // m) * m


def _pick_row_tile(m, max_tile):
    """Row (sublane) tiling: full extent if it fits, else max_tile (mult of 8)."""
    if m <= max_tile:
        return m, m
    return max_tile, _round_up(m, max_tile)


def _pick_col_tile(n, max_tile):
    """Column (lane) tiling: full extent if it fits, else the largest multiple of
    128 <= max_tile that divides the 128-padded width (no 50%-pad waste for
    e.g. d_out=2304 or 1024)."""
    if n <= max_tile:
        return n, n
    n_pad = _round_up(n, 128)
    t = (max_tile // 128) * 128
    while t > 128 and n_pad % t != 0:
        t -= 128
    if n_pad % t != 0:
        n_pad = _round_up(n_pad, t)
    return t, n_pad


def _head_group_width(d_model, head_dim):
    """Lane width of the per-grid-step head group: prefer a 128-lane slab holding
    an integer number of heads (lane-dense loads/stores); else full feature axis."""
    if d_model <= 128:
        return d_model
    if 128 % head_dim == 0:
        gw = 128
    elif head_dim % 128 == 0:
        gw = head_dim
    else:
        return d_model
    return gw if d_model % gw == 0 else d_model


def _col_block_map(off_blocks):
    # closure factory (keeps index_map arity == grid rank)
    return lambda b, g: (b, 0, off_blocks + g)


# ----------------------------- Pallas kernels --------------------------------


def linear_kernel(x_ref, w_ref, b_ref, o_ref):
    # x: (TM, Din), w: (Din, TN) pre-transposed, b: (1, TN) -> o: (TM, TN)
    o_ref[...] = (
        jnp.dot(x_ref[...], w_ref[...], preferred_element_type=jnp.float32)
        + b_ref[...]
    ).astype(o_ref.dtype)


def attention_kernel(q_ref, k_ref, v_ref, o_ref, *, heads_per_group, head_dim):
    # Blocks: q (1, Sq, GW), k/v (1, Skv, GW), o (1, Sq, GW); GW = heads_per_group*head_dim.
    # Scale is already folded into the Q projection weights.
    outs = []
    for h in range(heads_per_group):
        lo = h * head_dim
        hi = lo + head_dim
        qh = q_ref[0, :, lo:hi]   # (Sq, Dh)   ref-slice (no whole-block value slice)
        kh = k_ref[0, :, lo:hi]   # (Skv, Dh)
        vh = v_ref[0, :, lo:hi]   # (Skv, Dh)

        # Scores (Sq, Skv): contract head_dim directly on the MXU (no k.T copy).
        s = lax.dot_general(
            qh, kh,
            dimension_numbers=(((1,), (1,)), ((), ())),
            preferred_element_type=jnp.float32,
        )

        # Numerically-stable softmax; keep weights UNNORMALIZED here and
        # normalize after the PV matmul (elementwise pass shrinks from
        # (Sq, Skv) to (Sq, Dh); MXU result is unchanged — softmax is linear).
        m = jnp.max(s, axis=-1, keepdims=True)
        p = jnp.exp(s - m)
        l = jnp.sum(p, axis=-1, keepdims=True)          # (Sq, 1)

        # TODO(synk): attention-weight dropout omitted (eval-mode identity).

        oh = jnp.dot(p.astype(vh.dtype), vh, preferred_element_type=jnp.float32)
        inv_l = pl.reciprocal(l, approx=False)          # exact; tiny (Sq,1) vector
        outs.append(oh * inv_l)

    out = outs[0] if len(outs) == 1 else jnp.concatenate(outs, axis=-1)
    o_ref[0] = out.astype(o_ref.dtype)                  # single lane-dense GW-wide store


# ------------------------------ JAX wrappers ----------------------------------


def pallas_linear(x2d, w_t, b2, *, tm=512, max_tn=1024):
    """y = x2d @ w_t + b2; w_t is pre-transposed (Din, Dout), b2 is (1, Dout)."""
    M, d_in = x2d.shape
    d_out = w_t.shape[1]
    out_dtype = x2d.dtype
    itemsize = jnp.dtype(out_dtype).itemsize

    tm_, m_pad = _pick_row_tile(M, tm)
    tn_, n_pad = _pick_col_tile(d_out, max_tn)

    if m_pad != M:
        x2d = jnp.pad(x2d, ((0, m_pad - M), (0, 0)))
    if n_pad != d_out:  # only for d_out > max_tn and not 128-tileable (rare)
        w_t = jnp.pad(w_t, ((0, 0), (0, n_pad - d_out)))
        b2 = jnp.pad(b2, ((0, 0), (0, n_pad - d_out)))

    grid = (m_pad // tm_, n_pad // tn_)
    out = pl.pallas_call(
        linear_kernel,
        out_shape=jax.ShapeDtypeStruct((m_pad, n_pad), out_dtype),
        grid=grid,
        in_specs=[
            pl.BlockSpec((tm_, d_in), lambda i, j: (i, 0)),
            pl.BlockSpec((d_in, tn_), lambda i, j: (0, j)),
            pl.BlockSpec((1, tn_), lambda i, j: (0, j)),
        ],
        out_specs=pl.BlockSpec((tm_, tn_), lambda i, j: (i, j)),
        compiler_params=pltpu.CompilerParams(
            dimension_semantics=("parallel", "parallel"),
            vmem_limit_bytes=_VMEM_LIMIT),
        cost_estimate=pl.CostEstimate(
            flops=2 * m_pad * d_in * n_pad,
            transcendentals=0,
            bytes_accessed=itemsize * (m_pad * d_in * grid[1] + d_in * n_pad
                                       + n_pad + m_pad * n_pad)),
    )(x2d, w_t, b2)

    if (m_pad, n_pad) != (M, d_out):
        out = out[:M, :d_out]
    return out


def pallas_attention(q, k, v, n_heads, *, d_model=None, col_offsets=(0, 0, 0)):
    """Per-head softmax attention.

    q/k/v: (B, S, F) where F may be d_model, or 3*d_model for a packed [Q|K|V]
    array (then col_offsets gives each operand's element offset along features).
    Returns (B, Sq, d_model). Scale is assumed folded into the Q projection.
    """
    B, s_q = q.shape[0], q.shape[1]
    s_kv = k.shape[1]
    d_model = q.shape[2] if d_model is None else d_model
    head_dim = d_model // n_heads
    gw = _head_group_width(d_model, head_dim)
    n_groups = d_model // gw
    heads_per_group = gw // head_dim
    assert all(off % gw == 0 for off in col_offsets)
    q_off, k_off, v_off = (off // gw for off in col_offsets)

    kern = functools.partial(attention_kernel,
                             heads_per_group=heads_per_group, head_dim=head_dim)
    itemsize = jnp.dtype(q.dtype).itemsize

    return pl.pallas_call(
        kern,
        out_shape=jax.ShapeDtypeStruct((B, s_q, d_model), q.dtype),
        grid=(B, n_groups),
        in_specs=[
            pl.BlockSpec((1, s_q, gw), _col_block_map(q_off)),
            pl.BlockSpec((1, s_kv, gw), _col_block_map(k_off)),
            pl.BlockSpec((1, s_kv, gw), _col_block_map(v_off)),
        ],
        out_specs=pl.BlockSpec((1, s_q, gw), lambda b, g: (b, 0, g)),
        compiler_params=pltpu.CompilerParams(
            dimension_semantics=("parallel", "parallel"),
            vmem_limit_bytes=_VMEM_LIMIT),
        cost_estimate=pl.CostEstimate(
            flops=4 * B * s_q * s_kv * d_model,
            transcendentals=B * n_heads * s_q * s_kv,
            bytes_accessed=itemsize * (2 * B * s_q * d_model + 2 * B * s_kv * d_model)),
    )(q, k, v)


def prepare_mha_params(raw, n_heads):
    """One-time param prep: transpose weights, reshape biases, fold the
    1/sqrt(head_dim) scale into wq/bq, and build the packed [Q|K|V] weight."""
    d_model = raw["wq_w"].shape[0]
    head_dim = d_model // n_heads
    scale = 1.0 / (head_dim ** 0.5)

    wq_t = jnp.asarray(raw["wq_w"]).T * scale
    bq = (jnp.asarray(raw["wq_b"]) * scale).reshape(1, d_model)
    wk_t = jnp.asarray(raw["wk_w"]).T
    bk = jnp.asarray(raw["wk_b"]).reshape(1, d_model)
    wv_t = jnp.asarray(raw["wv_w"]).T
    bv = jnp.asarray(raw["wv_b"]).reshape(1, d_model)
    fc_t = jnp.asarray(raw["fc_w"]).T
    fcb = jnp.asarray(raw["fc_b"]).reshape(1, d_model)

    return dict(
        w_qkv_t=jnp.concatenate([wq_t, wk_t, wv_t], axis=1),  # (Din, 3*Dout)
        b_qkv=jnp.concatenate([bq, bk, bv], axis=1),           # (1, 3*Dout)
        wq_t=wq_t, bq=bq, wk_t=wk_t, bk=bk, wv_t=wv_t, bv=bv,
        fc_t=fc_t, fc_b=fcb,
    )


def multi_head_attention(params, query, key=None, value=None, mask=None, *, n_heads):
    """Reproduces MultiHeadAttention.forward (mask=None, eval-mode dropout)."""
    if mask is not None:
        raise NotImplementedError("mask handling not implemented")  # TODO(synk)
    if key is None:
        key = query
    if value is None:
        value = query

    B, s_q, d_model = query.shape

    if (key is query) and (value is query):
        # Self-attention fast path: single packed [Q|K|V] projection.
        qkv = pallas_linear(query.reshape(B * s_q, d_model),
                            params["w_qkv_t"], params["b_qkv"])
        qkv = qkv.reshape(B, s_q, 3 * d_model)
        if d_model % 128 == 0:
            # Attention reads Q/K/V straight out of the packed array via
            # column-offset index_maps — no HBM q/k/v slice copies.
            out = pallas_attention(qkv, qkv, qkv, n_heads, d_model=d_model,
                                   col_offsets=(0, d_model, 2 * d_model))
        else:
            q = qkv[..., :d_model]
            k = qkv[..., d_model:2 * d_model]
            v = qkv[..., 2 * d_model:]
            out = pallas_attention(q, k, v, n_heads)
    else:
        s_k, s_v = key.shape[1], value.shape[1]
        q = pallas_linear(query.reshape(B * s_q, d_model),
                          params["wq_t"], params["bq"]).reshape(B, s_q, d_model)
        k = pallas_linear(key.reshape(B * s_k, d_model),
                          params["wk_t"], params["bk"]).reshape(B, s_k, d_model)
        v = pallas_linear(value.reshape(B * s_v, d_model),
                          params["wv_t"], params["bv"]).reshape(B, s_v, d_model)
        out = pallas_attention(q, k, v, n_heads)

    out = pallas_linear(out.reshape(B * s_q, d_model),
                        params["fc_t"], params["fc_b"])
    return out.reshape(B, s_q, d_model)


# ----------------------------- reference (JAX) --------------------------------


def reference_mha(raw, query, key, value, n_heads):
    B, S, D = query.shape
    hd = D // n_heads

    def lin(x, w, b):
        return x @ w.T + b

    def split(x):
        return x.reshape(B, -1, n_heads, hd).transpose(0, 2, 1, 3)

    q = split(lin(query, raw["wq_w"], raw["wq_b"]))
    k = split(lin(key, raw["wk_w"], raw["wk_b"]))
    v = split(lin(value, raw["wv_w"], raw["wv_b"]))
    s = jnp.einsum("bhqd,bhkd->bhqk", q, k) / (hd ** 0.5)
    p = jax.nn.softmax(s, axis=-1)
    o = jnp.einsum("bhqk,bhkd->bhqd", p, v)
    o = o.transpose(0, 2, 1, 3).reshape(B, S, D)
    return lin(o, raw["fc_w"], raw["fc_b"])


# ---------------------------------- main ---------------------------------------


if __name__ == "__main__":
    def init_linear(kw, kb, d_out, d_in):
        bound = 1.0 / (d_in ** 0.5)
        w = jax.random.uniform(kw, (d_out, d_in), jnp.float32, -bound, bound)
        b = jax.random.uniform(kb, (d_out,), jnp.float32, -bound, bound)
        return w, b

    def build_case(key, B, S, D):
        keys = jax.random.split(key, 9)
        wq_w, wq_b = init_linear(keys[0], keys[1], D, D)
        wk_w, wk_b = init_linear(keys[2], keys[3], D, D)
        wv_w, wv_b = init_linear(keys[4], keys[5], D, D)
        fc_w, fc_b = init_linear(keys[6], keys[7], D, D)
        raw = dict(wq_w=wq_w, wq_b=wq_b, wk_w=wk_w, wk_b=wk_b,
                   wv_w=wv_w, wv_b=wv_b, fc_w=fc_w, fc_b=fc_b)
        x = jax.random.normal(keys[8], (B, S, D), jnp.float32)
        return raw, x

    key0 = jax.random.PRNGKey(0)
    k1, k2 = jax.random.split(key0)

    # Case 1: tiny shapes (exercises the d_model < 128 / full-extent-block path).
    # Case 2: 128-aligned d_model (exercises the packed-QKV + head-group-grid path).
    cases = [(k1, 2, 8, 32, 4), (k2, 2, 16, 256, 4)]

    for kk, B, S, D, H in cases:
        raw, x = build_case(kk, B, S, D)
        params = prepare_mha_params(raw, H)
        out = multi_head_attention(params, x, n_heads=H)
        out = jax.block_until_ready(out)
        ref = reference_mha(raw, x, x, x, H)
        assert out.shape == (B, S, D)
        assert jnp.allclose(out, ref, atol=5e-3, rtol=5e-3), (
            f"mismatch vs JAX reference for case B={B},S={S},D={D},H={H}")

    print("KERNEL_OK")
</pallas_src>

<mosaic_0001>
module attributes {stable_mosaic.version = 11 : i64} {
  func.func @linear_kernel(%arg0: i32, %arg1: i32, %arg2: memref<16x32xf32, #tpu.memory_space<vmem>>, %arg3: memref<32x96xf32, #tpu.memory_space<vmem>>, %arg4: memref<1x96xf32, #tpu.memory_space<vmem>>, %arg5: memref<16x96xf32, #tpu.memory_space<vmem>>) attributes {dimension_semantics = [#tpu.dimension_semantics<parallel>, #tpu.dimension_semantics<parallel>], iteration_bounds = array<i64: 1, 1>, scalar_prefetch = 0 : i64, scratch_operands = 0 : i64, tpu.core_type = #tpu.core_type<tc>, window_params = [{transform_indices = @transform_0, window_bounds = array<i64: 16, 32>}, {transform_indices = @transform_1, window_bounds = array<i64: 32, 96>}, {transform_indices = @transform_2, window_bounds = array<i64: 1, 96>}, {transform_indices = @transform_3, window_bounds = array<i64: 16, 96>}]} {
    %c0 = arith.constant 0 : index
    %c0_0 = arith.constant 0 : index
    %0 = vector.load %arg2[%c0, %c0_0] : memref<16x32xf32, #tpu.memory_space<vmem>>, vector<16x32xf32>
    %c0_1 = arith.constant 0 : index
    %c0_2 = arith.constant 0 : index
    %1 = vector.load %arg3[%c0_1, %c0_2] : memref<32x96xf32, #tpu.memory_space<vmem>>, vector<32x96xf32>
    %cst = arith.constant dense<0.000000e+00> : vector<16x96xf32>
    %2 = tpu.matmul %0, %1, %cst {dimension_numbers = #tpu.dot_dimension_numbers<[1], [0], [0], [1], [0, 0, 1, 1], [], []>} : vector<16x32xf32>, vector<32x96xf32>, vector<16x96xf32> -> vector<16x96xf32>
    %c0_3 = arith.constant 0 : index
    %c0_4 = arith.constant 0 : index
    %3 = vector.load %arg4[%c0_3, %c0_4] : memref<1x96xf32, #tpu.memory_space<vmem>>, vector<1x96xf32>
    %4 = vector.broadcast %3 : vector<1x96xf32> to vector<16x96xf32>
    %5 = arith.addf %2, %4 : vector<16x96xf32>
    %c0_5 = arith.constant 0 : index
    %c0_6 = arith.constant 0 : index
    %6 = vector.load %arg5[%c0_5, %c0_6] : memref<16x96xf32, #tpu.memory_space<vmem>>, vector<16x96xf32>
    tpu.vector_store %arg5[%c0_5, %c0_6], %5 {strides = array<i32>} : memref<16x96xf32, #tpu.memory_space<vmem>>, vector<16x96xf32>,
    return
  }
  func.func @transform_0(%arg0: i32, %arg1: i32) -> (i32, i32) {
    %c0_i32 = arith.constant 0 : i32
    %c0_i32_0 = arith.constant 0 : i32
    return %arg0, %c0_i32 : i32, i32
  }
  func.func @transform_1(%arg0: i32, %arg1: i32) -> (i32, i32) {
    %c0_i32 = arith.constant 0 : i32
    %c0_i32_0 = arith.constant 0 : i32
    return %c0_i32, %arg1 : i32, i32
  }
  func.func @transform_2(%arg0: i32, %arg1: i32) -> (i32, i32) {
    %c0_i32 = arith.constant 0 : i32
    %c0_i32_0 = arith.constant 0 : i32
    return %c0_i32, %arg1 : i32, i32
  }
  func.func @transform_3(%arg0: i32, %arg1: i32) -> (i32, i32) {
    %c0_i32 = arith.constant 0 : i32
    return %arg0, %arg1 : i32, i32
  }
}

</mosaic_0001>

<llo_original>
// kernel: tpu_custom_call.1
$region0: #{tpu_custom_call.1}
  #allocation0 [shape = 'u32[]', space=smem, size = 0x4, offset = 0x4, fixed_abs, tag = 'smem constant byte address 0x4 - core index']
  #allocation1 [shape = 'u32[144,128]{1,0:T(1,128)}', space=vmem, size = 0x12000, scoped, tag = 'internal scratch']
  %s0 = inlined_call_operand.hbm [shape: f32[16,32], index: 0, kind: input, shape index: {}]
  %s1 = inlined_call_operand.hbm [shape: f32[32,96], index: 1, kind: input, shape index: {}]
  %s2 = inlined_call_operand.vmem [shape: f32[1,96], index: 2, kind: input, shape index: {}]
  %s3 = inlined_call_operand.hbm [shape: f32[16,96], index: 3, kind: output, shape index: {}]
  %s4 = sld [smem:[#allocation0]]
  $region30: #{tpu_custom_call.1} parent=0
    _
  %s6 = ssub.s32 1, %s4
  %s7 = scalar_select 0, %s6, %s4
  $region1: #{tpu_custom_call.1} parent=0
    #allocation2 [shape = 'u8[8192]{0}', space=vmem, size = 0x2000, scoped, tag = 'input window, operand 0, single buffered']
    #allocation3 [shape = 's32[1]{0}', space=sflag, size = 0x4, scoped, tag = 'scoped memory for tpu_custom_call.1']
    #allocation4 [shape = 's32[1]{0}', space=sflag, size = 0x4, scoped, tag = 'scoped memory for tpu_custom_call.1']
    #allocation5 [shape = 'u8[16384]{0}', space=vmem, size = 0x4000, scoped, tag = 'input window, operand 1, single buffered']
    #allocation6 [shape = 's32[1]{0}', space=sflag, size = 0x4, scoped, tag = 'scoped memory for tpu_custom_call.1']
    #allocation7 [shape = 'u8[8192]{0}', space=vmem, size = 0x2000, scoped, tag = 'output window, operand 0, single buffered']
    %8 = vsyncpa [#allocation3], 0
    %9 = vsyncpa [#allocation6], 0
    %10 = vsyncpa [#allocation4], 0
    // Predicated region
    $region2: #{tpu_custom_call.1} parent=1 // pred_check
      _
    $region3: #{tpu_custom_call.1} parent=1 // pred_check_branch
      %12 = sbr.rel (0) target = $region5
    $region4: #{tpu_custom_call.1} parent=1 // pred_region
      %s14 = ssub.s32 256, 256
      %15 = vsyncadd [#allocation3], %s14
      %s16 = sshll.u32 [#allocation2], 4
      %s17 = int_to_ptr.vmem [resolvable:$true] %s16
      %22 = dma.hbm_to_vmem [thread:$0]  %s0, 256, %s17, [#allocation3], 128, 128, 8
    $region5: #{tpu_custom_call.1} parent=1 // pred_fallthru
      _
    // Predicated region
    $region6: #{tpu_custom_call.1} parent=1 // pred_check
      _
    $region7: #{tpu_custom_call.1} parent=1 // pred_check_branch
      %24 = sbr.rel (0) target = $region9
    $region8: #{tpu_custom_call.1} parent=1 // pred_region
      %s26 = ssub.s32 512, 512
      %27 = vsyncadd [#allocation6], %s26
      %s28 = sshll.u32 [#allocation5], 4
      %s29 = int_to_ptr.vmem [resolvable:$true] %s28
      %34 = dma.hbm_to_vmem [thread:$0]  %s1, 512, %s29, [#allocation6], 128, 128, 8
    $region9: #{tpu_custom_call.1} parent=1 // pred_fallthru
      _
    // Predicated region
    $region10: #{tpu_custom_call.1} parent=1 // pred_check
      _
    $region11: #{tpu_custom_call.1} parent=1 // pred_check_branch
      %36 = sbr.rel (0) target = $region13
    $region12: #{tpu_custom_call.1} parent=1 // pred_region
      _
    $region13: #{tpu_custom_call.1} parent=1 // pred_fallthru
      _
    // Predicated region
    $region14: #{tpu_custom_call.1} parent=1 // pred_check
      _
    $region15: #{tpu_custom_call.1} parent=1 // pred_check_branch
      %38 = sbr.rel (0) target = $region17
    $region16: #{tpu_custom_call.1} parent=1 // pred_region
      %39 = dma.done [#allocation3], 256
    $region17: #{tpu_custom_call.1} parent=1 // pred_fallthru
      _
    // Predicated region
    $region18: #{tpu_custom_call.1} parent=1 // pred_check
      _
    $region19: #{tpu_custom_call.1} parent=1 // pred_check_branch
      %41 = sbr.rel (0) target = $region21
    $region20: #{tpu_custom_call.1} parent=1 // pred_region
      %42 = dma.done [#allocation6], 512
    $region21: #{tpu_custom_call.1} parent=1 // pred_fallthru
      _
    %v43 = vld [vmem:[#allocation2] sm:$0xff]
    %v44 = vld [vmem:[#allocation2 + $0x8] sm:$0xff]
    %v45 = vld [vmem:[#allocation5] sm:$0xff]
    %v46 = vld [vmem:[#allocation5 + $0x8] sm:$0xff]
    %v47 = vld [vmem:[#allocation5 + $0x10] sm:$0xff]
    %v48 = vld [vmem:[#allocation5 + $0x18] sm:$0xff]
    %v49 = vld [vmem:[%s2] sm:$0x1]
    %v51 = vlaneseq
    %v52 = vshrl.u32 %v51, 7
    %v53 = vsub.s32 0, %v52
    %v54 = vrot.slane %v49, %v53
    %vm56 = vcmask 261120
    %v58 = vsel %vm56, %v43, 0
    %v61 = vsel %vm56, %v44, 0
    %63 = vmatprep.subr.mxu0 0.0
    %64 = vmatpush1.msra.mxu0 %v45
    %65 = vmatprep.subr.mxu0 0.0
    %66 = vmatpush1.msra.mxu0 %v46
    %67 = vmatprep.subr.mxu0 0.0
    %68 = vmatpush1.msra.mxu0 %v47
    %69 = vmatprep.subr.mxu0 0.0
    %70 = vmatpush1.msra.mxu0 %v48
    %71 = vmatprep.subr.mxu0 0.0
    %72 = vmatpush1.msra.mxu0 0.0
    %73 = vmatprep.subr.mxu0 0.0
    %74 = vmatpush1.msra.mxu0 0.0
    %75 = vmatprep.subr.mxu0 0.0
    %76 = vmatpush1.msra.mxu0 0.0
    %77 = vmatprep.subr.mxu0 0.0
    %78 = vmatpush1.msra.mxu0 0.0
    %79 = vmatprep.subr.mxu0 0.0
    %80 = vmatpush1.msra.mxu0 0.0
    %81 = vmatprep.subr.mxu0 0.0
    %82 = vmatpush1.msra.mxu0 0.0
    %83 = vmatprep.subr.mxu0 0.0
    %84 = vmatpush1.msra.mxu0 0.0
    %85 = vmatprep.subr.mxu0 0.0
    %86 = vmatpush1.msra.mxu0 0.0
    %87 = vmatprep.subr.mxu0 0.0
    %88 = vmatpush1.msra.mxu0 0.0
    %89 = vmatprep.subr.mxu0 0.0
    %90 = vmatpush1.msra.mxu0 0.0
    %91 = vmatprep.subr.mxu0 0.0
    %92 = vmatpush1.msra.mxu0 0.0
    %93 = vmatprep.subr.mxu0 0.0
    %94 = vmatpush1.msra.mxu0 0.0
    %95 = vmatprep.subr.mxu0 0.0
    %96 = vmatpush1.msra.mxu0 0.0
    %97 = vmatprep.subr.mxu0 0.0
    %98 = vmatpush1.msra.mxu0 0.0
    %99 = vmatprep.subr.mxu0 0.0
    %100 = vmatpush1.msra.mxu0 0.0
    %101 = vmatprep.subr.mxu0 0.0
    %102 = vmatpush1.msra.mxu0 0.0
    %103 = vmatprep.subr.mxu0 0.0
    %104 = vmatpush1.msra.mxu0 0.0
    %105 = vmatprep.subr.mxu0 0.0
    %106 = vmatpush1.msra.mxu0 0.0
    %107 = vmatprep.subr.mxu0 0.0
    %108 = vmatpush1.msra.mxu0 0.0
    %109 = vmatprep.subr.mxu0 0.0
    %110 = vmatpush1.msra.mxu0 0.0
    %111 = vmatprep.subr.mxu0 0.0
    %112 = vmatpush1.msra.mxu0 0.0
    %113 = vmatprep.subr.mxu0 0.0
    %114 = vmatpush1.msra.mxu0 0.0
    %115 = vmatprep.subr.mxu0 0.0
    %116 = vmatpush1.msra.mxu0 0.0
    %117 = vmatprep.subr.mxu0 0.0
    %118 = vmatpush1.msra.mxu0 0.0
    %119 = vmatprep.subr.mxu0 0.0
    %120 = vmatpush1.msra.mxu0 0.0
    %121 = vmatprep.subr.mxu0 0.0
    %122 = vmatpush1.msra.mxu0 0.0
    %123 = vmatprep.subr.mxu0 0.0
    %124 = vmatpush1.msra.mxu0 0.0
    %125 = vmatprep.subr.mxu0 0.0
    %126 = vmatpush1.msra.mxu0 0.0
    %127 = vmatprep.mubr.f32.mxu0 0.0
    %128 = vmatmul.mubr.f32.gmra.mrb[0].mxu0 %v58
    %v129 = vpop.f32.mrb[0].mxu0
    %v130 = vadd.f32 %v54, %v129
    %v131 = vpop.f32.mrb[0].mxu0
    %132 = vmatprep.mubr.f32.mxu0 0.0
    %133 = vmatmul.mubr.f32.gmra.mrb[0].mxu0 %v61
    %v134 = vpop.f32.mrb[0].mxu0
    %v135 = vadd.f32 %v54, %v134
    %v136 = vpop.f32.mrb[0].mxu0
    %137 = vdwg.mxu0
    %vm138 = vcmask 785408
    %139 = vst.msk [vmem:[#allocation7] sm:$0xff] %vm138, %v130
    %140 = vst.msk [vmem:[#allocation7 + $0x8] sm:$0xff] %vm138, %v135
    // Predicated region
    $region22: #{tpu_custom_call.1} parent=1 // pred_check
      _
    $region23: #{tpu_custom_call.1} parent=1 // pred_check_branch
      %142 = sbr.rel (0) target = $region25
    $region24: #{tpu_custom_call.1} parent=1 // pred_region
      %s144 = ssub.s32 256, 256
      %145 = vsyncadd [#allocation4], %s144
      %s146 = sshll.u32 [#allocation7], 4
      %s147 = int_to_ptr.vmem [resolvable:$true] %s146
      %152 = dma.vmem_to_hbm [thread:$0]  %s147, 256, %s3, [#allocation4], 128, 128, 8
    $region25: #{tpu_custom_call.1} parent=1 // pred_fallthru
      _
    // Predicated region
    $region26: #{tpu_custom_call.1} parent=1 // pred_check
      _
    $region27: #{tpu_custom_call.1} parent=1 // pred_check_branch
      %154 = sbr.rel (0) target = $region29
    $region28: #{tpu_custom_call.1} parent=1 // pred_region
      %155 = dma.done [#allocation4], 256
    $region29: #{tpu_custom_call.1} parent=1 // pred_fallthru
      _
    %156 = vsyncpa [#allocation3], 1
    %157 = vsyncpa [#allocation6], 1
    %158 = vsyncpa [#allocation4], 1

</llo_original>
